<compile_context>
chip_gen: v7x
topology: tpu7x:2x2x1
jax: 0.10.0
libtpu: 0.0.40
codegen_flags: <defaults>
</compile_context>

<pallas_src>
import functools

import numpy as np
import jax
import jax.numpy as jnp
from jax.experimental import pallas as pl
from jax.experimental.pallas import tpu as pltpu


def _pick_batch_tile(B, target=8):
    """Largest divisor of B that is <= target, preferring >= 2 grid steps (v7x 2 TCs)."""
    divs = [d for d in range(1, B + 1) if B % d == 0 and d <= target]
    multi = [d for d in divs if B // d >= 2]
    return max(multi) if multi else max(divs)


def _attention_dropout_kernel(x_ref, wk_ref, bk_ref, wq_ref, bq_ref, p_ref,
                              u_ref, m2_ref, s_ref, msel_ref,
                              idx_row_ref, idx_col_ref, bad_col_ref,
                              o_ref, *, C, HW, Np, N, TB):
    x_tile = x_ref[0]                       # (C, TB*HW) -- batch tile along lanes
    wk = wk_ref[...]                        # (C, C)
    wq = wq_ref[...]
    bk = bk_ref[...]                        # (C, 1)
    bq = bq_ref[...]
    P = p_ref[...]                          # (HW, Np) shared avg-pool matrix
    U = u_ref[...]                          # (Np, N)  row-flatten scatter
    M2 = m2_ref[...]                        # (C, N)   channel select mask
    S = s_ref[...]                          # (N, C)   col-flatten gather
    Msel = msel_ref[...]                    # (N, Np)  lane select mask
    idx_row = idx_row_ref[...]              # (1, N) int32 flat index (k / sorted pos)
    idx_col = idx_col_ref[...]              # (N, 1) int32 flat index (i)
    bad_col = bad_col_ref[...]              # (N, 1) f32  [i > TopK or i < BottomK]

    # 1x1 convolutions fused across the whole batch tile: one (C,C)x(C,TB*HW) matmul each.
    key = jnp.dot(wk, x_tile, preferred_element_type=jnp.float32) + bk
    query = jnp.dot(wq, x_tile, preferred_element_type=jnp.float32) + bq
    att = key * query                       # (C, TB*HW)

    TI = min(N, 512)                        # rank-pass chunk size (caps (TI, N) temps)

    for b in range(TB):                     # static unroll; TB is small
        att_b = att[:, b * HW:(b + 1) * HW]       # (C, HW), lane-aligned static slice
        val_b = x_tile[:, b * HW:(b + 1) * HW]    # (C, HW)

        # avg-pool via ONE shared (HW, Np) matmul per quantity.
        att_p = jnp.dot(att_b, P, preferred_element_type=jnp.float32)   # (C, Np)
        val_p = jnp.dot(val_b, P, preferred_element_type=jnp.float32)   # (C, Np)

        # Channel-major flatten (value.view(B, -1) order) without reshape/transpose:
        #   row form  (1, N): scatter each channel row into its lane block, sublane-reduce
        #   col form  (N, 1): gather channel rows onto sublanes, lane-select, lane-reduce
        # (0/1 scatter+mask sums are bit-exact, so row/col hold identical floats.)
        att_row = jnp.sum(
            jnp.dot(att_p, U, preferred_element_type=jnp.float32) * M2,
            axis=0, keepdims=True)                                       # (1, N)
        val_row = jnp.sum(
            jnp.dot(val_p, U, preferred_element_type=jnp.float32) * M2,
            axis=0, keepdims=True)                                       # (1, N)
        att_col = jnp.sum(
            jnp.dot(S, att_p, preferred_element_type=jnp.float32) * Msel,
            axis=1, keepdims=True)                                       # (N, 1)

        # Softmax omitted: monotonic, ranks of att == ranks of softmax(att).
        # rank[i] = #{k : a[k] > a[i]  or (a[k] == a[i] and k < i)}   (descending, stable)
        # PyTorch semantics: the value at *sorted position* rank[i] is zeroed when the
        # original index i is > TopK or < BottomK.  Rank + mask scatter fused per chunk.
        zero_row = jnp.zeros((1, N), jnp.float32)
        for i0 in range(0, N, TI):
            ti = min(TI, N - i0)
            a_i = att_col[i0:i0 + ti, :]            # (ti, 1)
            id_i = idx_col[i0:i0 + ti, :]           # (ti, 1)
            bad_i = bad_col[i0:i0 + ti, :]          # (ti, 1)
            beats = (att_row > a_i) | ((att_row == a_i) & (idx_row < id_i))   # (ti, N)
            rank_i = jnp.sum(beats.astype(jnp.int32), axis=1, keepdims=True)  # (ti, 1)
            onehot = (rank_i == idx_row).astype(jnp.float32)                  # (ti, N)
            zero_row = zero_row + jnp.sum(onehot * bad_i, axis=0, keepdims=True)

        o_ref[b] = val_row * (1.0 - zero_row)       # (1, N) row for batch g*TB + b


def attention_dropout(x, wk, bk, wq, bq, dropout_ratio, pool_factor=8):
    """x: (B, C, H, W) float32. wk/wq: (C, C). bk/bq: (C, 1). Returns (B, N)."""
    B, C, H, W = x.shape
    assert H % pool_factor == 0 and W % pool_factor == 0
    Hp, Wp = H // pool_factor, W // pool_factor
    Np = Hp * Wp
    N = C * Np
    HW = H * W
    # dropout_ratio is a static Python float (as in the PyTorch int(...) TopK/BottomK).
    top_k = int((1.0 - dropout_ratio / 2.0) * N)
    bottom_k = int(dropout_ratio / 2.0 * N)

    TB = _pick_batch_tile(B)
    G = B // TB

    # ---- host-built, grid-invariant constants (all tiny; no C*HW*N tensor) ----
    # Shared avg-pool matrix: P[h*W + w, (h//pf)*Wp + (w//pf)] = 1/pf^2
    hw = np.arange(HW)
    hh, ww = hw // W, hw % W
    pblk = (hh // pool_factor) * Wp + (ww // pool_factor)
    P = np.zeros((HW, Np), np.float32)
    P[hw, pblk] = 1.0 / float(pool_factor * pool_factor)

    # Channel-major flatten helpers (flat index p = c*Np + j).
    cj = np.arange(N)
    cc, jj = cj // Np, cj % Np
    U = np.zeros((Np, N), np.float32);   U[jj, cj] = 1.0      # row scatter
    M2 = np.zeros((C, N), np.float32);   M2[cc, cj] = 1.0     # channel select
    S = np.zeros((N, C), np.float32);    S[cj, cc] = 1.0      # col gather
    Msel = np.zeros((N, Np), np.float32); Msel[cj, jj] = 1.0  # lane select

    idx_row = np.arange(N, dtype=np.int32).reshape(1, N)
    idx_col = np.arange(N, dtype=np.int32).reshape(N, 1)
    bad_col = ((idx_col > top_k) | (idx_col < bottom_k)).astype(np.float32)

    # x: (B,C,H,W) -> (G, C, TB*HW): batch tile concatenated along the lane axis so the
    # key/query 1x1-conv matmuls run once per grid step over the whole tile.
    x_t = x.reshape(B, C, HW).astype(jnp.float32)
    x_t = x_t.reshape(G, TB, C, HW).transpose(0, 2, 1, 3).reshape(G, C, TB * HW)

    kernel = functools.partial(_attention_dropout_kernel,
                               C=C, HW=HW, Np=Np, N=N, TB=TB)

    out = pl.pallas_call(
        kernel,
        out_shape=jax.ShapeDtypeStruct((B, 1, N), jnp.float32),
        grid_spec=pltpu.PrefetchScalarGridSpec(
            num_scalar_prefetch=0,
            grid=(G,),
            in_specs=[
                pl.BlockSpec((1, C, TB * HW), lambda g: (g, 0, 0)),   # x batch tile
                pl.BlockSpec((C, C), lambda g: (0, 0)),               # Wk
                pl.BlockSpec((C, 1), lambda g: (0, 0)),               # bk
                pl.BlockSpec((C, C), lambda g: (0, 0)),               # Wq
                pl.BlockSpec((C, 1), lambda g: (0, 0)),               # bq
                pl.BlockSpec((HW, Np), lambda g: (0, 0)),             # P (shared pool)
                pl.BlockSpec((Np, N), lambda g: (0, 0)),              # U
                pl.BlockSpec((C, N), lambda g: (0, 0)),               # M2
                pl.BlockSpec((N, C), lambda g: (0, 0)),               # S
                pl.BlockSpec((N, Np), lambda g: (0, 0)),              # Msel
                pl.BlockSpec((1, N), lambda g: (0, 0)),               # idx_row
                pl.BlockSpec((N, 1), lambda g: (0, 0)),               # idx_col
                pl.BlockSpec((N, 1), lambda g: (0, 0)),               # bad_col
            ],
            out_specs=pl.BlockSpec((TB, 1, N), lambda g: (g, 0, 0)),
        ),
        compiler_params=pltpu.CompilerParams(
            dimension_semantics=("parallel",),          # shard batch tiles across TCs
            vmem_limit_bytes=32 * 1024 * 1024,
        ),
    )(x_t, wk, bk, wq, bq,
      jnp.asarray(P), jnp.asarray(U), jnp.asarray(M2), jnp.asarray(S),
      jnp.asarray(Msel), jnp.asarray(idx_row), jnp.asarray(idx_col),
      jnp.asarray(bad_col))
    return out.reshape(B, N)


def reference(x, wk, bk, wq, bq, dropout_ratio, pool_factor=8):
    """Pure-JAX reimplementation of the PyTorch forward (for sanity checking)."""
    B, C, H, W = x.shape
    key = jnp.einsum("oc,bchw->bohw", wk, x) + bk.reshape(1, C, 1, 1)
    query = jnp.einsum("oc,bchw->bohw", wq, x) + bq.reshape(1, C, 1, 1)

    def pool(t):
        return t.reshape(B, C, H // pool_factor, pool_factor,
                         W // pool_factor, pool_factor).mean(axis=(3, 5))

    value = pool(x).reshape(B, -1)
    att = pool(key * query).reshape(B, -1)
    att = jax.nn.softmax(att, axis=1)
    N = att.shape[1]
    top_k = int((1.0 - dropout_ratio / 2.0) * N)
    bottom_k = int(dropout_ratio / 2.0 * N)
    argsort_idx = jnp.argsort(-att, axis=1)          # descending, stable ties
    mask = (argsort_idx > top_k) | (argsort_idx < bottom_k)
    return jnp.where(mask, 0.0, value)


if __name__ == "__main__":
    B, C, H, W = 2, 4, 16, 16        # small shapes; pool_factor=8 -> N = 4*2*2 = 16
    dropout_ratio = 0.5

    root = jax.random.PRNGKey(0)
    kx, kwk, kbk, kwq, kbq = jax.random.split(root, 5)
    x = jax.random.normal(kx, (B, C, H, W), dtype=jnp.float32)
    wk = jax.random.normal(kwk, (C, C), dtype=jnp.float32) * 0.5   # key_conv weight
    bk = jax.random.normal(kbk, (C, 1), dtype=jnp.float32) * 0.1   # key_conv bias
    wq = jax.random.normal(kwq, (C, C), dtype=jnp.float32) * 0.5   # query_conv weight
    bq = jax.random.normal(kbq, (C, 1), dtype=jnp.float32) * 0.1   # query_conv bias

    out = attention_dropout(x, wk, bk, wq, bq, dropout_ratio)
    out = jax.block_until_ready(out)

    ref = reference(x, wk, bk, wq, bq, dropout_ratio)
    assert out.shape == (B, C * (H // 8) * (W // 8))
    assert bool(jnp.all(jnp.isfinite(out)))
    np.testing.assert_allclose(np.asarray(out), np.asarray(ref), rtol=1e-4, atol=1e-4)

    print("KERNEL_OK")
</pallas_src>

<mosaic_0001>
module attributes {stable_mosaic.version = 11 : i64} {
  func.func @_attention_dropout_kernel(%arg0: i32, %arg1: memref<1x4x256xf32, #tpu.memory_space<vmem>>, %arg2: memref<4x4xf32, #tpu.memory_space<vmem>>, %arg3: memref<4x1xf32, #tpu.memory_space<vmem>>, %arg4: memref<4x4xf32, #tpu.memory_space<vmem>>, %arg5: memref<4x1xf32, #tpu.memory_space<vmem>>, %arg6: memref<256x4xf32, #tpu.memory_space<vmem>>, %arg7: memref<4x16xf32, #tpu.memory_space<vmem>>, %arg8: memref<4x16xf32, #tpu.memory_space<vmem>>, %arg9: memref<16x4xf32, #tpu.memory_space<vmem>>, %arg10: memref<16x4xf32, #tpu.memory_space<vmem>>, %arg11: memref<1x16xi32, #tpu.memory_space<vmem>>, %arg12: memref<16x1xi32, #tpu.memory_space<vmem>>, %arg13: memref<16x1xf32, #tpu.memory_space<vmem>>, %arg14: memref<1x1x16xf32, #tpu.memory_space<vmem>>) attributes {dimension_semantics = [#tpu.dimension_semantics<parallel>], iteration_bounds = array<i64: 2>, scalar_prefetch = 0 : i64, scratch_operands = 0 : i64, tpu.core_type = #tpu.core_type<tc>, window_params = [{transform_indices = @transform_0, window_bounds = array<i64: 1, 4, 256>}, {pipeline_mode = #tpu.pipeline_mode<synchronous>, transform_indices = @transform_1, window_bounds = array<i64: 4, 4>}, {pipeline_mode = #tpu.pipeline_mode<synchronous>, transform_indices = @transform_2, window_bounds = array<i64: 4, 1>}, {pipeline_mode = #tpu.pipeline_mode<synchronous>, transform_indices = @transform_3, window_bounds = array<i64: 4, 4>}, {pipeline_mode = #tpu.pipeline_mode<synchronous>, transform_indices = @transform_4, window_bounds = array<i64: 4, 1>}, {pipeline_mode = #tpu.pipeline_mode<synchronous>, transform_indices = @transform_5, window_bounds = array<i64: 256, 4>}, {pipeline_mode = #tpu.pipeline_mode<synchronous>, transform_indices = @transform_6, window_bounds = array<i64: 4, 16>}, {pipeline_mode = #tpu.pipeline_mode<synchronous>, transform_indices = @transform_7, window_bounds = array<i64: 4, 16>}, {pipeline_mode = #tpu.pipeline_mode<synchronous>, transform_indices = @transform_8, window_bounds = array<i64: 16, 4>}, {pipeline_mode = #tpu.pipeline_mode<synchronous>, transform_indices = @transform_9, window_bounds = array<i64: 16, 4>}, {pipeline_mode = #tpu.pipeline_mode<synchronous>, transform_indices = @transform_10, window_bounds = array<i64: 1, 16>}, {pipeline_mode = #tpu.pipeline_mode<synchronous>, transform_indices = @transform_11, window_bounds = array<i64: 16, 1>}, {pipeline_mode = #tpu.pipeline_mode<synchronous>, transform_indices = @transform_12, window_bounds = array<i64: 16, 1>}, {transform_indices = @transform_13, window_bounds = array<i64: 1, 1, 16>}]} {
    %c0 = arith.constant 0 : index
    %c0_0 = arith.constant 0 : index
    %c0_1 = arith.constant 0 : index
    %0 = vector.load %arg1[%c0, %c0_0, %c0_1] : memref<1x4x256xf32, #tpu.memory_space<vmem>>, vector<1x4x256xf32>
    %1 = vector.shape_cast %0 : vector<1x4x256xf32> to vector<4x256xf32>
    %c0_2 = arith.constant 0 : index
    %c0_3 = arith.constant 0 : index
    %2 = vector.load %arg2[%c0_2, %c0_3] : memref<4x4xf32, #tpu.memory_space<vmem>>, vector<4x4xf32>
    %c0_4 = arith.constant 0 : index
    %c0_5 = arith.constant 0 : index
    %3 = vector.load %arg4[%c0_4, %c0_5] : memref<4x4xf32, #tpu.memory_space<vmem>>, vector<4x4xf32>
    %c0_6 = arith.constant 0 : index
    %c0_7 = arith.constant 0 : index
    %4 = vector.load %arg3[%c0_6, %c0_7] : memref<4x1xf32, #tpu.memory_space<vmem>>, vector<4x1xf32>
    %c0_8 = arith.constant 0 : index
    %c0_9 = arith.constant 0 : index
    %5 = vector.load %arg5[%c0_8, %c0_9] : memref<4x1xf32, #tpu.memory_space<vmem>>, vector<4x1xf32>
    %c0_10 = arith.constant 0 : index
    %c0_11 = arith.constant 0 : index
    %6 = vector.load %arg6[%c0_10, %c0_11] : memref<256x4xf32, #tpu.memory_space<vmem>>, vector<256x4xf32>
    %c0_12 = arith.constant 0 : index
    %c0_13 = arith.constant 0 : index
    %7 = vector.load %arg7[%c0_12, %c0_13] : memref<4x16xf32, #tpu.memory_space<vmem>>, vector<4x16xf32>
    %c0_14 = arith.constant 0 : index
    %c0_15 = arith.constant 0 : index
    %8 = vector.load %arg8[%c0_14, %c0_15] : memref<4x16xf32, #tpu.memory_space<vmem>>, vector<4x16xf32>
    %c0_16 = arith.constant 0 : index
    %c0_17 = arith.constant 0 : index
    %9 = vector.load %arg9[%c0_16, %c0_17] : memref<16x4xf32, #tpu.memory_space<vmem>>, vector<16x4xf32>
    %c0_18 = arith.constant 0 : index
    %c0_19 = arith.constant 0 : index
    %10 = vector.load %arg10[%c0_18, %c0_19] : memref<16x4xf32, #tpu.memory_space<vmem>>, vector<16x4xf32>
    %c0_20 = arith.constant 0 : index
    %c0_21 = arith.constant 0 : index
    %11 = vector.load %arg11[%c0_20, %c0_21] : memref<1x16xi32, #tpu.memory_space<vmem>>, vector<1x16xi32>
    %c0_22 = arith.constant 0 : index
    %c0_23 = arith.constant 0 : index
    %12 = vector.load %arg12[%c0_22, %c0_23] : memref<16x1xi32, #tpu.memory_space<vmem>>, vector<16x1xi32>
    %c0_24 = arith.constant 0 : index
    %c0_25 = arith.constant 0 : index
    %13 = vector.load %arg13[%c0_24, %c0_25] : memref<16x1xf32, #tpu.memory_space<vmem>>, vector<16x1xf32>
    %cst = arith.constant dense<0.000000e+00> : vector<4x256xf32>
    %14 = tpu.matmul %2, %1, %cst {dimension_numbers = #tpu.dot_dimension_numbers<[1], [0], [0], [1], [0, 0, 1, 1], [], []>} : vector<4x4xf32>, vector<4x256xf32>, vector<4x256xf32> -> vector<4x256xf32>
    %15 = vector.broadcast %4 : vector<4x1xf32> to vector<4x256xf32>
    %16 = arith.addf %14, %15 : vector<4x256xf32>
    %cst_26 = arith.constant dense<0.000000e+00> : vector<4x256xf32>
    %17 = tpu.matmul %3, %1, %cst_26 {dimension_numbers = #tpu.dot_dimension_numbers<[1], [0], [0], [1], [0, 0, 1, 1], [], []>} : vector<4x4xf32>, vector<4x256xf32>, vector<4x256xf32> -> vector<4x256xf32>
    %18 = vector.broadcast %5 : vector<4x1xf32> to vector<4x256xf32>
    %19 = arith.addf %17, %18 : vector<4x256xf32>
    %20 = arith.mulf %16, %19 : vector<4x256xf32>
    %cst_27 = arith.constant dense<0.000000e+00> : vector<4x4xf32>
    %21 = tpu.matmul %20, %6, %cst_27 {dimension_numbers = #tpu.dot_dimension_numbers<[1], [0], [0], [1], [0, 0, 1, 1], [], []>} : vector<4x256xf32>, vector<256x4xf32>, vector<4x4xf32> -> vector<4x4xf32>
    %cst_28 = arith.constant dense<0.000000e+00> : vector<4x4xf32>
    %22 = tpu.matmul %1, %6, %cst_28 {dimension_numbers = #tpu.dot_dimension_numbers<[1], [0], [0], [1], [0, 0, 1, 1], [], []>} : vector<4x256xf32>, vector<256x4xf32>, vector<4x4xf32> -> vector<4x4xf32>
    %cst_29 = arith.constant dense<0.000000e+00> : vector<4x16xf32>
    %23 = tpu.matmul %21, %7, %cst_29 {dimension_numbers = #tpu.dot_dimension_numbers<[1], [0], [0], [1], [0, 0, 1, 1], [], []>} : vector<4x4xf32>, vector<4x16xf32>, vector<4x16xf32> -> vector<4x16xf32>
    %24 = arith.mulf %23, %8 : vector<4x16xf32>
    %cst_30 = arith.constant dense<0.000000e+00> : vector<16xf32>
    %25 = vector.multi_reduction <add>, %24, %cst_30 [0] : vector<4x16xf32> to vector<16xf32>
    %26 = vector.shape_cast %25 : vector<16xf32> to vector<1x16xf32>
    %cst_31 = arith.constant dense<0.000000e+00> : vector<4x16xf32>
    %27 = tpu.matmul %22, %7, %cst_31 {dimension_numbers = #tpu.dot_dimension_numbers<[1], [0], [0], [1], [0, 0, 1, 1], [], []>} : vector<4x4xf32>, vector<4x16xf32>, vector<4x16xf32> -> vector<4x16xf32>
    %28 = arith.mulf %27, %8 : vector<4x16xf32>
    %cst_32 = arith.constant dense<0.000000e+00> : vector<16xf32>
    %29 = vector.multi_reduction <add>, %28, %cst_32 [0] : vector<4x16xf32> to vector<16xf32>
    %30 = vector.shape_cast %29 : vector<16xf32> to vector<1x16xf32>
    %cst_33 = arith.constant dense<0.000000e+00> : vector<16x4xf32>
    %31 = tpu.matmul %9, %21, %cst_33 {dimension_numbers = #tpu.dot_dimension_numbers<[1], [0], [0], [1], [0, 0, 1, 1], [], []>} : vector<16x4xf32>, vector<4x4xf32>, vector<16x4xf32> -> vector<16x4xf32>
    %32 = arith.mulf %31, %10 : vector<16x4xf32>
    %cst_34 = arith.constant dense<0.000000e+00> : vector<16xf32>
    %33 = vector.multi_reduction <add>, %32, %cst_34 [1] : vector<16x4xf32> to vector<16xf32>
    %34 = vector.shape_cast %33 : vector<16xf32> to vector<16x1xf32>
    %cst_35 = arith.constant 0.000000e+00 : f32
    %35 = vector.broadcast %cst_35 : f32 to vector<1x16xf32>
    %36 = vector.broadcast %26 : vector<1x16xf32> to vector<16x16xf32>
    %37 = vector.broadcast %34 : vector<16x1xf32> to vector<16x16xf32>
    %38 = arith.cmpf ogt, %36, %37 : vector<16x16xf32>
    %39 = vector.broadcast %26 : vector<1x16xf32> to vector<16x16xf32>
    %40 = vector.broadcast %34 : vector<16x1xf32> to vector<16x16xf32>
    %41 = arith.cmpf oeq, %39, %40 : vector<16x16xf32>
    %42 = vector.broadcast %11 : vector<1x16xi32> to vector<16x16xi32>
    %43 = vector.broadcast %12 : vector<16x1xi32> to vector<16x16xi32>
    %44 = arith.cmpi slt, %42, %43 : vector<16x16xi32>
    %45 = arith.andi %41, %44 : vector<16x16xi1>
    %46 = arith.ori %38, %45 : vector<16x16xi1>
    %47 = arith.extui %46 : vector<16x16xi1> to vector<16x16xi32>
    %cst_36 = arith.constant dense<0> : vector<16xi32>
    %48 = vector.multi_reduction <add>, %47, %cst_36 [1] : vector<16x16xi32> to vector<16xi32>
    %49 = vector.shape_cast %48 : vector<16xi32> to vector<16x1xi32>
    %50 = vector.broadcast %49 : vector<16x1xi32> to vector<16x16xi32>
    %51 = vector.broadcast %11 : vector<1x16xi32> to vector<16x16xi32>
    %52 = arith.cmpi eq, %50, %51 : vector<16x16xi32>
    %53 = arith.extui %52 : vector<16x16xi1> to vector<16x16xi32>
    %54 = arith.sitofp %53 : vector<16x16xi32> to vector<16x16xf32>
    %55 = vector.broadcast %13 : vector<16x1xf32> to vector<16x16xf32>
    %56 = arith.mulf %54, %55 : vector<16x16xf32>
    %cst_37 = arith.constant dense<0.000000e+00> : vector<16xf32>
    %57 = vector.multi_reduction <add>, %56, %cst_37 [0] : vector<16x16xf32> to vector<16xf32>
    %58 = vector.shape_cast %57 : vector<16xf32> to vector<1x16xf32>
    %59 = arith.addf %35, %58 : vector<1x16xf32>
    %cst_38 = arith.constant 1.000000e+00 : f32
    %60 = vector.broadcast %cst_38 : f32 to vector<1x16xf32>
    %61 = arith.subf %60, %59 : vector<1x16xf32>
    %62 = arith.mulf %30, %61 : vector<1x16xf32>
    %c0_39 = arith.constant 0 : index
    %c0_40 = arith.constant 0 : index
    %c0_41 = arith.constant 0 : index
    %63 = vector.load %arg14[%c0_39, %c0_40, %c0_41] : memref<1x1x16xf32, #tpu.memory_space<vmem>>, vector<1x1x16xf32>
    %64 = vector.shape_cast %63 : vector<1x1x16xf32> to vector<1x16xf32>
    %65 = vector.shape_cast %62 : vector<1x16xf32> to vector<1x1x16xf32>
    tpu.vector_store %arg14[%c0_39, %c0_40, %c0_41], %65 {strides = array<i32>} : memref<1x1x16xf32, #tpu.memory_space<vmem>>, vector<1x1x16xf32>,
    return
  }
  func.func @transform_0(%arg0: i32) -> (i32, i32, i32) {
    %c0_i32 = arith.constant 0 : i32
    %c0_i32_0 = arith.constant 0 : i32
    %c0_i32_1 = arith.constant 0 : i32
    return %arg0, %c0_i32, %c0_i32_0 : i32, i32, i32
  }
  func.func @transform_1(%arg0: i32) -> (i32, i32) {
    %c0_i32 = arith.constant 0 : i32
    %c0_i32_0 = arith.constant 0 : i32
    %c0_i32_1 = arith.constant 0 : i32
    return %c0_i32, %c0_i32_0 : i32, i32
  }
  func.func @transform_2(%arg0: i32) -> (i32, i32) {
    %c0_i32 = arith.constant 0 : i32
    %c0_i32_0 = arith.constant 0 : i32
    %c0_i32_1 = arith.constant 0 : i32
    return %c0_i32, %c0_i32_0 : i32, i32
  }
  func.func @transform_3(%arg0: i32) -> (i32, i32) {
    %c0_i32 = arith.constant 0 : i32
    %c0_i32_0 = arith.constant 0 : i32
    %c0_i32_1 = arith.constant 0 : i32
    return %c0_i32, %c0_i32_0 : i32, i32
  }
  func.func @transform_4(%arg0: i32) -> (i32, i32) {
    %c0_i32 = arith.constant 0 : i32
    %c0_i32_0 = arith.constant 0 : i32
    %c0_i32_1 = arith.constant 0 : i32
    return %c0_i32, %c0_i32_0 : i32, i32
  }
  func.func @transform_5(%arg0: i32) -> (i32, i32) {
    %c0_i32 = arith.constant 0 : i32
    %c0_i32_0 = arith.constant 0 : i32
    %c0_i32_1 = arith.constant 0 : i32
    return %c0_i32, %c0_i32_0 : i32, i32
  }
  func.func @transform_6(%arg0: i32) -> (i32, i32) {
    %c0_i32 = arith.constant 0 : i32
    %c0_i32_0 = arith.constant 0 : i32
    %c0_i32_1 = arith.constant 0 : i32
    return %c0_i32, %c0_i32_0 : i32, i32
  }
  func.func @transform_7(%arg0: i32) -> (i32, i32) {
    %c0_i32 = arith.constant 0 : i32
    %c0_i32_0 = arith.constant 0 : i32
    %c0_i32_1 = arith.constant 0 : i32
    return %c0_i32, %c0_i32_0 : i32, i32
  }
  func.func @transform_8(%arg0: i32) -> (i32, i32) {
    %c0_i32 = arith.constant 0 : i32
    %c0_i32_0 = arith.constant 0 : i32
    %c0_i32_1 = arith.constant 0 : i32
    return %c0_i32, %c0_i32_0 : i32, i32
  }
  func.func @transform_9(%arg0: i32) -> (i32, i32) {
    %c0_i32 = arith.constant 0 : i32
    %c0_i32_0 = arith.constant 0 : i32
    %c0_i32_1 = arith.constant 0 : i32
    return %c0_i32, %c0_i32_0 : i32, i32
  }
  func.func @transform_10(%arg0: i32) -> (i32, i32) {
    %c0_i32 = arith.constant 0 : i32
    %c0_i32_0 = arith.constant 0 : i32
    %c0_i32_1 = arith.constant 0 : i32
    return %c0_i32, %c0_i32_0 : i32, i32
  }
  func.func @transform_11(%arg0: i32) -> (i32, i32) {
    %c0_i32 = arith.constant 0 : i32
    %c0_i32_0 = arith.constant 0 : i32
    %c0_i32_1 = arith.constant 0 : i32
    return %c0_i32, %c0_i32_0 : i32, i32
  }
  func.func @transform_12(%arg0: i32) -> (i32, i32) {
    %c0_i32 = arith.constant 0 : i32
    %c0_i32_0 = arith.constant 0 : i32
    %c0_i32_1 = arith.constant 0 : i32
    return %c0_i32, %c0_i32_0 : i32, i32
  }
  func.func @transform_13(%arg0: i32) -> (i32, i32, i32) {
    %c0_i32 = arith.constant 0 : i32
    %c0_i32_0 = arith.constant 0 : i32
    %c0_i32_1 = arith.constant 0 : i32
    return %arg0, %c0_i32, %c0_i32_0 : i32, i32, i32
  }
}

</mosaic_0001>

<llo_original>
// kernel: tpu_custom_call.1
$region0: #{tpu_custom_call.1}
  #allocation0 [shape = 'u32[]', space=smem, size = 0x4, offset = 0x4, fixed_abs, tag = 'smem constant byte address 0x4 - core index']
  #allocation1 [shape = 'u32[144,128]{1,0:T(1,128)}', space=vmem, size = 0x12000, scoped, tag = 'internal scratch']
  %s0 = inlined_call_operand.vmem [shape: f32[2,4,256], index: 0, kind: input, shape index: {}]
  %s1 = inlined_call_operand.vmem [shape: f32[4,4], index: 1, kind: input, shape index: {}]
  %s2 = inlined_call_operand.vmem [shape: f32[4,1], index: 2, kind: input, shape index: {}]
  %s3 = inlined_call_operand.vmem [shape: f32[4,4], index: 3, kind: input, shape index: {}]
  %s4 = inlined_call_operand.vmem [shape: f32[4,1], index: 4, kind: input, shape index: {}]
  %s5 = inlined_call_operand.vmem [shape: f32[256,4], index: 5, kind: input, shape index: {}]
  %s6 = inlined_call_operand.vmem [shape: f32[4,16], index: 6, kind: input, shape index: {}]
  %s7 = inlined_call_operand.vmem [shape: f32[4,16], index: 7, kind: input, shape index: {}]
  %s8 = inlined_call_operand.vmem [shape: f32[16,4], index: 8, kind: input, shape index: {}]
  %s9 = inlined_call_operand.vmem [shape: f32[16,4], index: 9, kind: input, shape index: {}]
  %s10 = inlined_call_operand.vmem [shape: s32[1,16], index: 10, kind: input, shape index: {}]
  %s11 = inlined_call_operand.vmem [shape: s32[16,1], index: 11, kind: input, shape index: {}]
  %s12 = inlined_call_operand.vmem [shape: f32[16,1], index: 12, kind: input, shape index: {}]
  %s13 = inlined_call_operand.hbm [shape: f32[2,1,16], index: 13, kind: output, shape index: {}]
  %s14 = sld [smem:[#allocation0]]
  $region85: #{tpu_custom_call.1} parent=0
    _
  %s16 = ssub.s32 1, %s14
  %s17 = scalar_select 0, %s16, %s14
  $region1: #{tpu_custom_call.1} parent=0
    #allocation2 [shape = 'u8[1024]{0}', space=vmem, size = 0x400, scoped, tag = 'output window, operand 0']
    #allocation3 [shape = 's32[2]{0}', space=sflag, size = 0x8, scoped, tag = 'scoped memory for tpu_custom_call.1']
    %18 = vsyncpa [#allocation3], 0
    %s19 = scalar_lea.sflag [#allocation3], 1
    %20 = vsyncpa %s19, 0
    loop: start=0, step=1, limit=4
    $region2: #{tpu_custom_call.1} parent=1 // loop_pre_header
      _
    $region3: #{tpu_custom_call.1} parent=1 // loop_header
      %s22 = sphi 0, %s26
      %p23 = scmp.ge.s32.totalorder %s22, 4
      %s32 = sphi 0, %s34
      %s35 = sphi 0, %s32
      %s36 = sphi 0, %s35
      %s52 = sphi 0, %s36
      %s56 = sphi 0, %s56
      %s58 = sphi 0, %s56
      %s59 = sphi 0, %s58
      %s73 = sphi 0, %s59
      %s77 = sphi 0, %s77
      %s79 = sphi 0, %s77
      %s80 = sphi 0, %s79
      %s94 = sphi 0, %s80
      %s98 = sphi 0, %s98
      %s100 = sphi 0, %s98
      %s101 = sphi 0, %s100
      %s115 = sphi 0, %s101
      %s119 = sphi 0, %s119
      %s121 = sphi 0, %s119
      %s122 = sphi 0, %s121
      %s136 = sphi 0, %s122
      %s140 = sphi 0, %s140
      %s142 = sphi 0, %s140
      %s143 = sphi 0, %s142
      %s157 = sphi 0, %s143
      %s161 = sphi 0, %s161
      %s163 = sphi 0, %s161
      %s164 = sphi 0, %s163
      %s178 = sphi 0, %s164
      %s182 = sphi 0, %s182
      %s184 = sphi 0, %s182
      %s185 = sphi 0, %s184
      %s199 = sphi 0, %s185
      %s203 = sphi 0, %s203
      %s205 = sphi 0, %s203
      %s206 = sphi 0, %s205
      %s220 = sphi 0, %s206
      %s224 = sphi 0, %s224
      %s226 = sphi 0, %s224
      %s227 = sphi 0, %s226
      %s241 = sphi 0, %s227
      %s245 = sphi 0, %s245
      %s247 = sphi 0, %s245
      %s248 = sphi 0, %s247
      %s262 = sphi 0, %s248
      %s266 = sphi 0, %s266
      %s268 = sphi 0, %s266
      %s269 = sphi 0, %s268
      %s283 = sphi 0, %s269
      %s287 = sphi 0, %s287
      %s289 = sphi 0, %s287
      %s290 = sphi 0, %s289
      %s304 = sphi 0, %s290
      %s310 = sphi 0, %s312
      %s313 = sphi 0, %s310
      %s314 = sphi 0, %s313
      %s330 = sphi 0, %s314
    $region4: #{tpu_custom_call.1} parent=1 // loop_header_branch
      %25 = sbr.rel (%p23) target = $region8
    $region5: #{tpu_custom_call.1} parent=1 // loop_body
      %s27 = ssub.s32 %s22, 1
      %s28 = ssub.s32 %s22, 2
      %s29 = sadd.s32 %s22, 1
      %s30 = ssub.s32 %s22, %s29
      %p31 = scmp.eq.s32.totalorder %s30, 0
      %s33 = sadd.s32 %s32, 1
      %s34 = scalar_select %p31, %s32, %s33
      %p37 = pneg %p31
      %p38 = scmp.eq.s32.totalorder %s22, 1
      %p39 = por %p37, %p38
      %p40 = scmp.ne.s32.totalorder %s32, %s35
      %p41 = scmp.eq.s32.totalorder %s22, 0
      %p42 = por %p40, %p41
      %p43 = scmp.ne.s32.totalorder %s32, %s35
      %p44 = scmp.eq.s32.totalorder %s27, 1
      %p45 = por %p43, %p44
      %p46 = scmp.ne.s32.totalorder %s35, %s36
      %p47 = scmp.eq.s32.totalorder %s27, 0
      %p48 = por %p46, %p47
      %p49 = scmp.ne.s32.totalorder %s35, %s36
      %p50 = scmp.eq.s32.totalorder %s28, 1
      %p51 = por %p49, %p50
      %p53 = scmp.ne.s32.totalorder %s36, %s52
      %p54 = scmp.eq.s32.totalorder %s28, 0
      %p55 = por %p53, %p54
      %s57 = sadd.s32 %s56, 1
      %p60 = scmp.eq.s32.totalorder %s22, 1
      %p61 = scmp.ne.s32.totalorder %s56, %s58
      %p62 = scmp.eq.s32.totalorder %s22, 0
      %p63 = por %p61, %p62
      %p64 = scmp.ne.s32.totalorder %s56, %s58
      %p65 = scmp.eq.s32.totalorder %s27, 1
      %p66 = por %p64, %p65
      %p67 = scmp.ne.s32.totalorder %s58, %s59
      %p68 = scmp.eq.s32.totalorder %s27, 0
      %p69 = por %p67, %p68
      %p70 = scmp.ne.s32.totalorder %s58, %s59
      %p71 = scmp.eq.s32.totalorder %s28, 1
      %p72 = por %p70, %p71
      %p74 = scmp.ne.s32.totalorder %s59, %s73
      %p75 = scmp.eq.s32.totalorder %s28, 0
      %p76 = por %p74, %p75
      %s78 = sadd.s32 %s77, 1
      %p81 = scmp.eq.s32.totalorder %s22, 1
      %p82 = scmp.ne.s32.totalorder %s77, %s79
      %p83 = scmp.eq.s32.totalorder %s22, 0
      %p84 = por %p82, %p83
      %p85 = scmp.ne.s32.totalorder %s77, %s79
      %p86 = scmp.eq.s32.totalorder %s27, 1
      %p87 = por %p85, %p86
      %p88 = scmp.ne.s32.totalorder %s79, %s80
      %p89 = scmp.eq.s32.totalorder %s27, 0
      %p90 = por %p88, %p89
      %p91 = scmp.ne.s32.totalorder %s79, %s80
      %p92 = scmp.eq.s32.totalorder %s28, 1
      %p93 = por %p91, %p92
      %p95 = scmp.ne.s32.totalorder %s80, %s94
      %p96 = scmp.eq.s32.totalorder %s28, 0
      %p97 = por %p95, %p96
      %s99 = sadd.s32 %s98, 1
      %p102 = scmp.eq.s32.totalorder %s22, 1
      %p103 = scmp.ne.s32.totalorder %s98, %s100
      %p104 = scmp.eq.s32.totalorder %s22, 0
      %p105 = por %p103, %p104
      %p106 = scmp.ne.s32.totalorder %s98, %s100
      %p107 = scmp.eq.s32.totalorder %s27, 1
      %p108 = por %p106, %p107
      %p109 = scmp.ne.s32.totalorder %s100, %s101
      %p110 = scmp.eq.s32.totalorder %s27, 0
      %p111 = por %p109, %p110
      %p112 = scmp.ne.s32.totalorder %s100, %s101
      %p113 = scmp.eq.s32.totalorder %s28, 1
      %p114 = por %p112, %p113
      %p116 = scmp.ne.s32.totalorder %s101, %s115
      %p117 = scmp.eq.s32.totalorder %s28, 0
      %p118 = por %p116, %p117
      %s120 = sadd.s32 %s119, 1
      %p123 = scmp.eq.s32.totalorder %s22, 1
      %p124 = scmp.ne.s32.totalorder %s119, %s121
      %p125 = scmp.eq.s32.totalorder %s22, 0
      %p126 = por %p124, %p125
      %p127 = scmp.ne.s32.totalorder %s119, %s121
      %p128 = scmp.eq.s32.totalorder %s27, 1
      %p129 = por %p127, %p128
      %p130 = scmp.ne.s32.totalorder %s121, %s122
      %p131 = scmp.eq.s32.totalorder %s27, 0
      %p132 = por %p130, %p131
      %p133 = scmp.ne.s32.totalorder %s121, %s122
      %p134 = scmp.eq.s32.totalorder %s28, 1
      %p135 = por %p133, %p134
      %p137 = scmp.ne.s32.totalorder %s122, %s136
      %p138 = scmp.eq.s32.totalorder %s28, 0
      %p139 = por %p137, %p138
      %s141 = sadd.s32 %s140, 1
      %p144 = scmp.eq.s32.totalorder %s22, 1
      %p145 = scmp.ne.s32.totalorder %s140, %s142
      %p146 = scmp.eq.s32.totalorder %s22, 0
      %p147 = por %p145, %p146
      %p148 = scmp.ne.s32.totalorder %s140, %s142
      %p149 = scmp.eq.s32.totalorder %s27, 1
      %p150 = por %p148, %p149
      %p151 = scmp.ne.s32.totalorder %s142, %s143
      %p152 = scmp.eq.s32.totalorder %s27, 0
      %p153 = por %p151, %p152
      %p154 = scmp.ne.s32.totalorder %s142, %s143
      %p155 = scmp.eq.s32.totalorder %s28, 1
      %p156 = por %p154, %p155
      %p158 = scmp.ne.s32.totalorder %s143, %s157
      %p159 = scmp.eq.s32.totalorder %s28, 0
      %p160 = por %p158, %p159
      %s162 = sadd.s32 %s161, 1
      %p165 = scmp.eq.s32.totalorder %s22, 1
      %p166 = scmp.ne.s32.totalorder %s161, %s163
      %p167 = scmp.eq.s32.totalorder %s22, 0
      %p168 = por %p166, %p167
      %p169 = scmp.ne.s32.totalorder %s161, %s163
      %p170 = scmp.eq.s32.totalorder %s27, 1
      %p171 = por %p169, %p170
      %p172 = scmp.ne.s32.totalorder %s163, %s164
      %p173 = scmp.eq.s32.totalorder %s27, 0
      %p174 = por %p172, %p173
      %p175 = scmp.ne.s32.totalorder %s163, %s164
      %p176 = scmp.eq.s32.totalorder %s28, 1
      %p177 = por %p175, %p176
      %p179 = scmp.ne.s32.totalorder %s164, %s178
      %p180 = scmp.eq.s32.totalorder %s28, 0
      %p181 = por %p179, %p180
      %s183 = sadd.s32 %s182, 1
      %p186 = scmp.eq.s32.totalorder %s22, 1
      %p187 = scmp.ne.s32.totalorder %s182, %s184
      %p188 = scmp.eq.s32.totalorder %s22, 0
      %p189 = por %p187, %p188
      %p190 = scmp.ne.s32.totalorder %s182, %s184
      %p191 = scmp.eq.s32.totalorder %s27, 1
      %p192 = por %p190, %p191
      %p193 = scmp.ne.s32.totalorder %s184, %s185
      %p194 = scmp.eq.s32.totalorder %s27, 0
      %p195 = por %p193, %p194
      %p196 = scmp.ne.s32.totalorder %s184, %s185
      %p197 = scmp.eq.s32.totalorder %s28, 1
      %p198 = por %p196, %p197
      %p200 = scmp.ne.s32.totalorder %s185, %s199
      %p201 = scmp.eq.s32.totalorder %s28, 0
      %p202 = por %p200, %p201
      %s204 = sadd.s32 %s203, 1
      %p207 = scmp.eq.s32.totalorder %s22, 1
      %p208 = scmp.ne.s32.totalorder %s203, %s205
      %p209 = scmp.eq.s32.totalorder %s22, 0
      %p210 = por %p208, %p209
      %p211 = scmp.ne.s32.totalorder %s203, %s205
      %p212 = scmp.eq.s32.totalorder %s27, 1
      %p213 = por %p211, %p212
      %p214 = scmp.ne.s32.totalorder %s205, %s206
      %p215 = scmp.eq.s32.totalorder %s27, 0
      %p216 = por %p214, %p215
      %p217 = scmp.ne.s32.totalorder %s205, %s206
      %p218 = scmp.eq.s32.totalorder %s28, 1
      %p219 = por %p217, %p218
      %p221 = scmp.ne.s32.totalorder %s206, %s220
      %p222 = scmp.eq.s32.totalorder %s28, 0
      %p223 = por %p221, %p222
      %s225 = sadd.s32 %s224, 1
      %p228 = scmp.eq.s32.totalorder %s22, 1
      %p229 = scmp.ne.s32.totalorder %s224, %s226
      %p230 = scmp.eq.s32.totalorder %s22, 0
      %p231 = por %p229, %p230
      %p232 = scmp.ne.s32.totalorder %s224, %s226
      %p233 = scmp.eq.s32.totalorder %s27, 1
      %p234 = por %p232, %p233
      %p235 = scmp.ne.s32.totalorder %s226, %s227
      %p236 = scmp.eq.s32.totalorder %s27, 0
      %p237 = por %p235, %p236
      %p238 = scmp.ne.s32.totalorder %s226, %s227
      %p239 = scmp.eq.s32.totalorder %s28, 1
      %p240 = por %p238, %p239
      %p242 = scmp.ne.s32.totalorder %s227, %s241
      %p243 = scmp.eq.s32.totalorder %s28, 0
      %p244 = por %p242, %p243
      %s246 = sadd.s32 %s245, 1
      %p249 = scmp.eq.s32.totalorder %s22, 1
      %p250 = scmp.ne.s32.totalorder %s245, %s247
      %p251 = scmp.eq.s32.totalorder %s22, 0
      %p252 = por %p250, %p251
      %p253 = scmp.ne.s32.totalorder %s245, %s247
      %p254 = scmp.eq.s32.totalorder %s27, 1
      %p255 = por %p253, %p254
      %p256 = scmp.ne.s32.totalorder %s247, %s248
      %p257 = scmp.eq.s32.totalorder %s27, 0
      %p258 = por %p256, %p257
      %p259 = scmp.ne.s32.totalorder %s247, %s248
      %p260 = scmp.eq.s32.totalorder %s28, 1
      %p261 = por %p259, %p260
      %p263 = scmp.ne.s32.totalorder %s248, %s262
      %p264 = scmp.eq.s32.totalorder %s28, 0
      %p265 = por %p263, %p264
      %s267 = sadd.s32 %s266, 1
      %p270 = scmp.eq.s32.totalorder %s22, 1
      %p271 = scmp.ne.s32.totalorder %s266, %s268
      %p272 = scmp.eq.s32.totalorder %s22, 0
      %p273 = por %p271, %p272
      %p274 = scmp.ne.s32.totalorder %s266, %s268
      %p275 = scmp.eq.s32.totalorder %s27, 1
      %p276 = por %p274, %p275
      %p277 = scmp.ne.s32.totalorder %s268, %s269
      %p278 = scmp.eq.s32.totalorder %s27, 0
      %p279 = por %p277, %p278
      %p280 = scmp.ne.s32.totalorder %s268, %s269
      %p281 = scmp.eq.s32.totalorder %s28, 1
      %p282 = por %p280, %p281
      %p284 = scmp.ne.s32.totalorder %s269, %s283
      %p285 = scmp.eq.s32.totalorder %s28, 0
      %p286 = por %p284, %p285
      %s288 = sadd.s32 %s287, 1
      %p291 = scmp.eq.s32.totalorder %s22, 1
      %p292 = scmp.ne.s32.totalorder %s287, %s289
      %p293 = scmp.eq.s32.totalorder %s22, 0
      %p294 = por %p292, %p293
      %p295 = scmp.ne.s32.totalorder %s287, %s289
      %p296 = scmp.eq.s32.totalorder %s27, 1
      %p297 = por %p295, %p296
      %p298 = scmp.ne.s32.totalorder %s289, %s290
      %p299 = scmp.eq.s32.totalorder %s27, 0
      %p300 = por %p298, %p299
      %p301 = scmp.ne.s32.totalorder %s289, %s290
      %p302 = scmp.eq.s32.totalorder %s28, 1
      %p303 = por %p301, %p302
      %p305 = scmp.ne.s32.totalorder %s290, %s304
      %p306 = scmp.eq.s32.totalorder %s28, 0
      %p307 = por %p305, %p306
      %s308 = ssub.s32 %s22, %s29
      %p309 = scmp.eq.s32.totalorder %s308, 0
      %s311 = sadd.s32 %s310, 1
      %s312 = scalar_select %p309, %s310, %s311
      %p315 = pneg %p309
      %p316 = scmp.eq.s32.totalorder %s22, 1
      %p317 = por %p315, %p316
      %p318 = scmp.ne.s32.totalorder %s310, %s313
      %p319 = scmp.eq.s32.totalorder %s22, 0
      %p320 = por %p318, %p319
      %p321 = scmp.ne.s32.totalorder %s310, %s313
      %p322 = scmp.eq.s32.totalorder %s27, 1
      %p323 = por %p321, %p322
      %p324 = scmp.ne.s32.totalorder %s313, %s314
      %p325 = scmp.eq.s32.totalorder %s27, 0
      %p326 = por %p324, %p325
      %p327 = scmp.ne.s32.totalorder %s313, %s314
      %p328 = scmp.eq.s32.totalorder %s28, 1
      %p329 = por %p327, %p328
      %p331 = scmp.ne.s32.totalorder %s314, %s330
      %p332 = scmp.eq.s32.totalorder %s28, 0
      %p333 = por %p331, %p332
      %p334 = scmp.le.s32.totalorder 1, %s22
      %p335 = scmp.lt.s32.totalorder %s22, 3
      %p336 = pnand %p334, %p335
      %p337 = pneg %p336
      // Predicated region
      $region9: #{tpu_custom_call.1} parent=5 // pred_check
        _
      $region10: #{tpu_custom_call.1} parent=5 // pred_check_branch
        %339 = sbr.rel (%p336) target = $region12
      $region11: #{tpu_custom_call.1} parent=5 // pred_region
        %s340 = ssub.s32 %s22, 1
        // Predicated region
        $region13: #{tpu_custom_call.1} parent=11 // pred_check
          %p341 = pneg %p69
        $region14: #{tpu_custom_call.1} parent=11 // pred_check_branch
          %343 = sbr.rel (%p341) target = $region16
        $region15: #{tpu_custom_call.1} parent=11 // pred_region
          _
        $region16: #{tpu_custom_call.1} parent=11 // pred_fallthru
          _
        // Predicated region
        $region17: #{tpu_custom_call.1} parent=11 // pred_check
          %p344 = pneg %p90
        $region18: #{tpu_custom_call.1} parent=11 // pred_check_branch
          %346 = sbr.rel (%p344) target = $region20
        $region19: #{tpu_custom_call.1} parent=11 // pred_region
          _
        $region20: #{tpu_custom_call.1} parent=11 // pred_fallthru
          _
        // Predicated region
        $region21: #{tpu_custom_call.1} parent=11 // pred_check
          %p347 = pneg %p111
        $region22: #{tpu_custom_call.1} parent=11 // pred_check_branch
          %349 = sbr.rel (%p347) target = $region24
        $region23: #{tpu_custom_call.1} parent=11 // pred_region
          _
        $region24: #{tpu_custom_call.1} parent=11 // pred_fallthru
          _
        // Predicated region
        $region25: #{tpu_custom_call.1} parent=11 // pred_check
          %p350 = pneg %p132
        $region26: #{tpu_custom_call.1} parent=11 // pred_check_branch
          %352 = sbr.rel (%p350) target = $region28
        $region27: #{tpu_custom_call.1} parent=11 // pred_region
          _
        $region28: #{tpu_custom_call.1} parent=11 // pred_fallthru
          _
        // Predicated region
        $region29: #{tpu_custom_call.1} parent=11 // pred_check
          %p353 = pneg %p153
        $region30: #{tpu_custom_call.1} parent=11 // pred_check_branch
          %355 = sbr.rel (%p353) target = $region32
        $region31: #{tpu_custom_call.1} parent=11 // pred_region
          _
        $region32: #{tpu_custom_call.1} parent=11 // pred_fallthru
          _
        // Predicated region
        $region33: #{tpu_custom_call.1} parent=11 // pred_check
          %p356 = pneg %p174
        $region34: #{tpu_custom_call.1} parent=11 // pred_check_branch
          %358 = sbr.rel (%p356) target = $region36
        $region35: #{tpu_custom_call.1} parent=11 // pred_region
          _
        $region36: #{tpu_custom_call.1} parent=11 // pred_fallthru
          _
        // Predicated region
        $region37: #{tpu_custom_call.1} parent=11 // pred_check
          %p359 = pneg %p195
        $region38: #{tpu_custom_call.1} parent=11 // pred_check_branch
          %361 = sbr.rel (%p359) target = $region40
        $region39: #{tpu_custom_call.1} parent=11 // pred_region
          _
        $region40: #{tpu_custom_call.1} parent=11 // pred_fallthru
          _
        // Predicated region
        $region41: #{tpu_custom_call.1} parent=11 // pred_check
          %p362 = pneg %p216
        $region42: #{tpu_custom_call.1} parent=11 // pred_check_branch
          %364 = sbr.rel (%p362) target = $region44
        $region43: #{tpu_custom_call.1} parent=11 // pred_region
          _
        $region44: #{tpu_custom_call.1} parent=11 // pred_fallthru
          _
        // Predicated region
        $region45: #{tpu_custom_call.1} parent=11 // pred_check
          %p365 = pneg %p237
        $region46: #{tpu_custom_call.1} parent=11 // pred_check_branch
          %367 = sbr.rel (%p365) target = $region48
        $region47: #{tpu_custom_call.1} parent=11 // pred_region
          _
        $region48: #{tpu_custom_call.1} parent=11 // pred_fallthru
          _
        // Predicated region
        $region49: #{tpu_custom_call.1} parent=11 // pred_check
          %p368 = pneg %p258
        $region50: #{tpu_custom_call.1} parent=11 // pred_check_branch
          %370 = sbr.rel (%p368) target = $region52
        $region51: #{tpu_custom_call.1} parent=11 // pred_region
          _
        $region52: #{tpu_custom_call.1} parent=11 // pred_fallthru
          _
        // Predicated region
        $region53: #{tpu_custom_call.1} parent=11 // pred_check
          %p371 = pneg %p279
        $region54: #{tpu_custom_call.1} parent=11 // pred_check_branch
          %373 = sbr.rel (%p371) target = $region56
        $region55: #{tpu_custom_call.1} parent=11 // pred_region
          _
        $region56: #{tpu_custom_call.1} parent=11 // pred_fallthru
          _
        // Predicated region
        $region57: #{tpu_custom_call.1} parent=11 // pred_check
          %p374 = pneg %p300
        $region58: #{tpu_custom_call.1} parent=11 // pred_check_branch
          %376 = sbr.rel (%p374) target = $region60
        $region59: #{tpu_custom_call.1} parent=11 // pred_region
          _
        $region60: #{tpu_custom_call.1} parent=11 // pred_fallthru
          _
      $region12: #{tpu_custom_call.1} parent=5 // pred_fallthru
        _
      %p377 = scmp.lt.s32.totalorder %s22, 2
      // Predicated region
      $region61: #{tpu_custom_call.1} parent=5 // pred_check
        %p378 = pneg %p377
      $region62: #{tpu_custom_call.1} parent=5 // pred_check_branch
        %380 = sbr.rel (%p378) target = $region64
      $region63: #{tpu_custom_call.1} parent=5 // pred_region
        // Predicated region
        $region65: #{tpu_custom_call.1} parent=63 // pred_check
          %p381 = pneg %p42
        $region66: #{tpu_custom_call.1} parent=63 // pred_check_branch
          %383 = sbr.rel (%p381) target = $region68
        $region67: #{tpu_custom_call.1} parent=63 // pred_region
          %p384 = scmp.lt.s32.totalorder %s22, 1
          %s385 = scalar_select %p384, %s22, 1
          %s386 = smul.addr %s385, 2
          %s387 = smul.addr %s386, 4
          %s388 = scalar_lea.vmem %s0, %s387
        $region68: #{tpu_custom_call.1} parent=63 // pred_fallthru
          _
      $region64: #{tpu_custom_call.1} parent=5 // pred_fallthru
        _
      %p389 = scmp.le.s32.totalorder 1, %s22
      %p390 = scmp.lt.s32.totalorder %s22, 3
      %p391 = pnand %p389, %p390
      %p392 = pneg %p391
      // Predicated region
      $region69: #{tpu_custom_call.1} parent=5 // pred_check
        _
      $region70: #{tpu_custom_call.1} parent=5 // pred_check_branch
        %394 = sbr.rel (%p391) target = $region72
      $region71: #{tpu_custom_call.1} parent=5 // pred_region
        %s395 = ssub.s32 %s22, 1
        %p396 = scmp.lt.s32.totalorder %s27, 1
        %s397 = scalar_select %p396, %s27, 1
        %s398 = smul.addr %s397, 2
        %s399 = smul.addr %s398, 4
        %s400 = scalar_lea.vmem %s0, %s399
        %p401 = pneg %p48
        %p402 = pneg %p45
        %p403 = pneg %p69
        %p404 = pneg %p66
        %p405 = pneg %p90
        %p406 = pneg %p87
        %p407 = pneg %p111
        %p408 = pneg %p108
        %p409 = pneg %p132
        %p410 = pneg %p129
        %p411 = pneg %p153
        %p412 = pneg %p150
        %p413 = pneg %p174
        %p414 = pneg %p171
        %p415 = pneg %p195
        %p416 = pneg %p192
        %p417 = pneg %p216
        %p418 = pneg %p213
        %p419 = pneg %p237
        %p420 = pneg %p234
        %p421 = pneg %p258
        %p422 = pneg %p255
        %p423 = pneg %p279
        %p424 = pneg %p276
        %p425 = pneg %p300
        %p426 = pneg %p297
        %p427 = pneg %p326
        %p428 = pneg %p323
        %s429 = sand.u32 %s313, 1
        %s430 = scalar_lea.sflag [#allocation3], %s429
        %s431 = sand.u32 %s313, 1
        %s432 = scalar_lea.vmem [#allocation2], %s431
        %p433 = scmp.lt.s32.totalorder %s27, 1
        %s434 = scalar_select %p433, %s27, 1
        %s435 = smul.addr %s434, 2
        %s436 = smul.addr %s435, 4
        %s437 = scalar_lea.vmem %s0, %s436
        %v438 = vld [vmem:[%s437] sm:$0xff]
        %v439 = vld [vmem:[%s1] sm:$0xf]
        %v440 = vld [vmem:[%s3] sm:$0xf]
        %v441 = vld [vmem:[%s2] sm:$0xf]
        %v442 = vld [vmem:[%s4] sm:$0xf]
        %v443 = vld [vmem:[%s5] sm:$0xff]
        %v444 = vld [vmem:[%s5 + $0x8] sm:$0xff]
        %v445 = vld [vmem:[%s5 + $0x10] sm:$0xff]
        %v446 = vld [vmem:[%s5 + $0x18] sm:$0xff]
        %v447 = vld [vmem:[%s5 + $0x20] sm:$0xff]
        %v448 = vld [vmem:[%s5 + $0x28] sm:$0xff]
        %v449 = vld [vmem:[%s5 + $0x30] sm:$0xff]
        %v450 = vld [vmem:[%s5 + $0x38] sm:$0xff]
        %v451 = vld [vmem:[%s5 + $0x40] sm:$0xff]
        %v452 = vld [vmem:[%s5 + $0x48] sm:$0xff]
        %v453 = vld [vmem:[%s5 + $0x50] sm:$0xff]
        %v454 = vld [vmem:[%s5 + $0x58] sm:$0xff]
        %v455 = vld [vmem:[%s5 + $0x60] sm:$0xff]
        %v456 = vld [vmem:[%s5 + $0x68] sm:$0xff]
        %v457 = vld [vmem:[%s5 + $0x70] sm:$0xff]
        %v458 = vld [vmem:[%s5 + $0x78] sm:$0xff]
        %v459 = vld [vmem:[%s5 + $0x80] sm:$0xff]
        %v460 = vld [vmem:[%s5 + $0x88] sm:$0xff]
        %v461 = vld [vmem:[%s5 + $0x90] sm:$0xff]
        %v462 = vld [vmem:[%s5 + $0x98] sm:$0xff]
        %v463 = vld [vmem:[%s5 + $0xa0] sm:$0xff]
        %v464 = vld [vmem:[%s5 + $0xa8] sm:$0xff]
        %v465 = vld [vmem:[%s5 + $0xb0] sm:$0xff]
        %v466 = vld [vmem:[%s5 + $0xb8] sm:$0xff]
        %v467 = vld [vmem:[%s5 + $0xc0] sm:$0xff]
        %v468 = vld [vmem:[%s5 + $0xc8] sm:$0xff]
        %v469 = vld [vmem:[%s5 + $0xd0] sm:$0xff]
        %v470 = vld [vmem:[%s5 + $0xd8] sm:$0xff]
        %v471 = vld [vmem:[%s5 + $0xe0] sm:$0xff]
        %v472 = vld [vmem:[%s5 + $0xe8] sm:$0xff]
        %v473 = vld [vmem:[%s5 + $0xf0] sm:$0xff]
        %v474 = vld [vmem:[%s5 + $0xf8] sm:$0xff]
        %v475 = vld [vmem:[%s6] sm:$0xf]
        %v476 = vld [vmem:[%s7] sm:$0xf]
        %v477 = vld [vmem:[%s8] sm:$0xff]
        %v478 = vld [vmem:[%s8 + $0x8] sm:$0xff]
        %v479 = vld [vmem:[%s9] sm:$0xff]
        %v480 = vld [vmem:[%s9 + $0x8] sm:$0xff]
        %v481 = vld [vmem:[%s10] sm:$0x1]
        %v482 = vld [vmem:[%s11] sm:$0xff]
        %v483 = vld [vmem:[%s11 + $0x8] sm:$0xff]
        %v484 = vld [vmem:[%s12] sm:$0xff]
        %v485 = vld [vmem:[%s12 + $0x8] sm:$0xff]
        %487 = vset.pattern.permute.xlu0 0
        %488 = vperm.xlu0 %487, %v441
        %v489 = vpop.permute.xlu0 %488
        %v492 = vcombine.high %v438, %v438
        %vm493 = vcmask 31744
        %v495 = vsel %vm493, %v439, 0
        %vm497 = vcmask 1043456
        %v498 = vsel %vm497, %v438, 0
        %v500 = vsel %vm497, %v492, 0
        %502 = vmatprep.subr.mxu0 %v500
        %503 = vmatpush1.msra.mxu0 %v498
        %504 = vmatprep.subr.mxu0 0.0
        %505 = vmatpush1.msra.mxu0 0.0
        %506 = vmatprep.subr.mxu0 0.0
        %507 = vmatpush1.msra.mxu0 0.0
        %508 = vmatprep.subr.mxu0 0.0
        %509 = vmatpush1.msra.mxu0 0.0
        %510 = vmatprep.subr.mxu0 0.0
        %511 = vmatpush1.msra.mxu0 0.0
        %512 = vmatprep.subr.mxu0 0.0
        %513 = vmatpush1.msra.mxu0 0.0
        %514 = vmatprep.subr.mxu0 0.0
        %515 = vmatpush1.msra.mxu0 0.0
        %516 = vmatprep.subr.mxu0 0.0
        %517 = vmatpush1.msra.mxu0 0.0
        %518 = vmatprep.subr.mxu0 0.0
        %519 = vmatpush1.msra.mxu0 0.0
        %520 = vmatprep.subr.mxu0 0.0
        %521 = vmatpush1.msra.mxu0 0.0
        %522 = vmatprep.subr.mxu0 0.0
        %523 = vmatpush1.msra.mxu0 0.0
        %524 = vmatprep.subr.mxu0 0.0
        %525 = vmatpush1.msra.mxu0 0.0
        %526 = vmatprep.subr.mxu0 0.0
        %527 = vmatpush1.msra.mxu0 0.0
        %528 = vmatprep.subr.mxu0 0.0
        %529 = vmatpush1.msra.mxu0 0.0
        %530 = vmatprep.subr.mxu0 0.0
        %531 = vmatpush1.msra.mxu0 0.0
        %532 = vmatprep.subr.mxu0 0.0
        %533 = vmatpush1.msra.mxu0 0.0
        %534 = vmatprep.subr.mxu0 0.0
        %535 = vmatpush1.msra.mxu0 0.0
        %536 = vmatprep.subr.mxu0 0.0
        %537 = vmatpush1.msra.mxu0 0.0
        %538 = vmatprep.subr.mxu0 0.0
        %539 = vmatpush1.msra.mxu0 0.0
        %540 = vmatprep.subr.mxu0 0.0
        %541 = vmatpush1.msra.mxu0 0.0
        %542 = vmatprep.subr.mxu0 0.0
        %543 = vmatpush1.msra.mxu0 0.0
        %544 = vmatprep.subr.mxu0 0.0
        %545 = vmatpush1.msra.mxu0 0.0
        %546 = vmatprep.subr.mxu0 0.0
        %547 = vmatpush1.msra.mxu0 0.0
        %548 = vmatprep.subr.mxu0 0.0
        %549 = vmatpush1.msra.mxu0 0.0
        %550 = vmatprep.subr.mxu0 0.0
        %551 = vmatpush1.msra.mxu0 0.0
        %552 = vmatprep.subr.mxu0 0.0
        %553 = vmatpush1.msra.mxu0 0.0
        %554 = vmatprep.subr.mxu0 0.0
        %555 = vmatpush1.msra.mxu0 0.0
        %556 = vmatprep.subr.mxu0 0.0
        %557 = vmatpush1.msra.mxu0 0.0
        %558 = vmatprep.subr.mxu0 0.0
        %559 = vmatpush1.msra.mxu0 0.0
        %560 = vmatprep.subr.mxu0 0.0
        %561 = vmatpush1.msra.mxu0 0.0
        %562 = vmatprep.subr.mxu0 0.0
        %563 = vmatpush1.msra.mxu0 0.0
        %564 = vmatprep.subr.mxu0 0.0
        %565 = vmatpush1.msra.mxu0 0.0
        %566 = vmatprep.mubr.f32.mxu0 0.0
        %567 = vmatmul.mubr.f32.gmra.mrb[0].mxu0 %v495
        %v568 = vpop.f32.mrb[0].mxu0
        %v569 = vadd.f32 %v489, %v568
        %v570 = vpop.f32.mrb[0].mxu0
        %v571 = vadd.f32 %v489, %v570
        %572 = vdwg.mxu0
        %574 = vset.pattern.permute.xlu0 0
        %575 = vperm.xlu0 %574, %v442
        %v576 = vpop.permute.xlu0 %575
        %v579 = vsel %vm493, %v440, 0
        %581 = vmatprep.subr.mxu0 %v500
        %582 = vmatpush1.msra.mxu0 %v498
        %583 = vmatprep.subr.mxu0 0.0
        %584 = vmatpush1.msra.mxu0 0.0
        %585 = vmatprep.subr.mxu0 0.0
        %586 = vmatpush1.msra.mxu0 0.0
        %587 = vmatprep.subr.mxu0 0.0
        %588 = vmatpush1.msra.mxu0 0.0
        %589 = vmatprep.subr.mxu0 0.0
        %590 = vmatpush1.msra.mxu0 0.0
        %591 = vmatprep.subr.mxu0 0.0
        %592 = vmatpush1.msra.mxu0 0.0
        %593 = vmatprep.subr.mxu0 0.0
        %594 = vmatpush1.msra.mxu0 0.0
        %595 = vmatprep.subr.mxu0 0.0
        %596 = vmatpush1.msra.mxu0 0.0
        %597 = vmatprep.subr.mxu0 0.0
        %598 = vmatpush1.msra.mxu0 0.0
        %599 = vmatprep.subr.mxu0 0.0
        %600 = vmatpush1.msra.mxu0 0.0
        %601 = vmatprep.subr.mxu0 0.0
        %602 = vmatpush1.msra.mxu0 0.0
        %603 = vmatprep.subr.mxu0 0.0
        %604 = vmatpush1.msra.mxu0 0.0
        %605 = vmatprep.subr.mxu0 0.0
        %606 = vmatpush1.msra.mxu0 0.0
        %607 = vmatprep.subr.mxu0 0.0
        %608 = vmatpush1.msra.mxu0 0.0
        %609 = vmatprep.subr.mxu0 0.0
        %610 = vmatpush1.msra.mxu0 0.0
        %611 = vmatprep.subr.mxu0 0.0
        %612 = vmatpush1.msra.mxu0 0.0
        %613 = vmatprep.subr.mxu0 0.0
        %614 = vmatpush1.msra.mxu0 0.0
        %615 = vmatprep.subr.mxu0 0.0
        %616 = vmatpush1.msra.mxu0 0.0
        %617 = vmatprep.subr.mxu0 0.0
        %618 = vmatpush1.msra.mxu0 0.0
        %619 = vmatprep.subr.mxu0 0.0
        %620 = vmatpush1.msra.mxu0 0.0
        %621 = vmatprep.subr.mxu0 0.0
        %622 = vmatpush1.msra.mxu0 0.0
        %623 = vmatprep.subr.mxu0 0.0
        %624 = vmatpush1.msra.mxu0 0.0
        %625 = vmatprep.subr.mxu0 0.0
        %626 = vmatpush1.msra.mxu0 0.0
        %627 = vmatprep.subr.mxu0 0.0
        %628 = vmatpush1.msra.mxu0 0.0
        %629 = vmatprep.subr.mxu0 0.0
        %630 = vmatpush1.msra.mxu0 0.0
        %631 = vmatprep.subr.mxu0 0.0
        %632 = vmatpush1.msra.mxu0 0.0
        %633 = vmatprep.subr.mxu0 0.0
        %634 = vmatpush1.msra.mxu0 0.0
        %635 = vmatprep.subr.mxu0 0.0
        %636 = vmatpush1.msra.mxu0 0.0
        %637 = vmatprep.subr.mxu0 0.0
        %638 = vmatpush1.msra.mxu0 0.0
        %639 = vmatprep.subr.mxu0 0.0
        %640 = vmatpush1.msra.mxu0 0.0
        %641 = vmatprep.subr.mxu0 0.0
        %642 = vmatpush1.msra.mxu0 0.0
        %643 = vmatprep.subr.mxu0 0.0
        %644 = vmatpush1.msra.mxu0 0.0
        %645 = vmatprep.mubr.f32.mxu0 0.0
        %646 = vmatmul.mubr.f32.gmra.mrb[0].mxu0 %v579
        %v647 = vpop.f32.mrb[0].mxu0
        %v648 = vadd.f32 %v576, %v647
        %v649 = vpop.f32.mrb[0].mxu0
        %v650 = vadd.f32 %v576, %v649
        %651 = vdwg.mxu0
        %v652 = vmul.f32 %v569, %v648
        %v653 = vmul.f32 %v571, %v650
        %654 = vmatprep.subr.mxu0 0.0
        %655 = vmatpush1.msra.mxu0 %v443
        %656 = vmatprep.subr.mxu0 0.0
        %657 = vmatpush1.msra.mxu0 %v444
        %658 = vmatprep.subr.mxu0 0.0
        %659 = vmatpush1.msra.mxu0 %v445
        %660 = vmatprep.subr.mxu0 0.0
        %661 = vmatpush1.msra.mxu0 %v446
        %662 = vmatprep.subr.mxu0 0.0
        %663 = vmatpush1.msra.mxu0 %v447
        %664 = vmatprep.subr.mxu0 0.0
        %665 = vmatpush1.msra.mxu0 %v448
        %666 = vmatprep.subr.mxu0 0.0
        %667 = vmatpush1.msra.mxu0 %v449
        %668 = vmatprep.subr.mxu0 0.0
        %669 = vmatpush1.msra.mxu0 %v450
        %670 = vmatprep.subr.mxu0 0.0
        %671 = vmatpush1.msra.mxu0 %v451
        %672 = vmatprep.subr.mxu0 0.0
        %673 = vmatpush1.msra.mxu0 %v452
        %674 = vmatprep.subr.mxu0 0.0
        %675 = vmatpush1.msra.mxu0 %v453
        %676 = vmatprep.subr.mxu0 0.0
        %677 = vmatpush1.msra.mxu0 %v454
        %678 = vmatprep.subr.mxu0 0.0
        %679 = vmatpush1.msra.mxu0 %v455
        %680 = vmatprep.subr.mxu0 0.0
        %681 = vmatpush1.msra.mxu0 %v456
        %682 = vmatprep.subr.mxu0 0.0
        %683 = vmatpush1.msra.mxu0 %v457
        %684 = vmatprep.subr.mxu0 0.0
        %685 = vmatpush1.msra.mxu0 %v458
        %686 = vmatprep.subr.mxu0 0.0
        %687 = vmatpush1.msra.mxu0 %v459
        %688 = vmatprep.subr.mxu0 0.0
        %689 = vmatpush1.msra.mxu0 %v460
        %690 = vmatprep.subr.mxu0 0.0
        %691 = vmatpush1.msra.mxu0 %v461
        %692 = vmatprep.subr.mxu0 0.0
        %693 = vmatpush1.msra.mxu0 %v462
        %694 = vmatprep.subr.mxu0 0.0
        %695 = vmatpush1.msra.mxu0 %v463
        %696 = vmatprep.subr.mxu0 0.0
        %697 = vmatpush1.msra.mxu0 %v464
        %698 = vmatprep.subr.mxu0 0.0
        %699 = vmatpush1.msra.mxu0 %v465
        %700 = vmatprep.subr.mxu0 0.0
        %701 = vmatpush1.msra.mxu0 %v466
        %702 = vmatprep.subr.mxu0 0.0
        %703 = vmatpush1.msra.mxu0 %v467
        %704 = vmatprep.subr.mxu0 0.0
        %705 = vmatpush1.msra.mxu0 %v468
        %706 = vmatprep.subr.mxu0 0.0
        %707 = vmatpush1.msra.mxu0 %v469
        %708 = vmatprep.subr.mxu0 0.0
        %709 = vmatpush1.msra.mxu0 %v470
        %710 = vmatprep.subr.mxu0 0.0
        %711 = vmatpush1.msra.mxu0 %v471
        %712 = vmatprep.subr.mxu0 0.0
        %713 = vmatpush1.msra.mxu0 %v472
        %714 = vmatprep.subr.mxu0 0.0
        %715 = vmatpush1.msra.mxu0 %v473
        %716 = vmatprep.subr.mxu0 0.0
        %717 = vmatpush1.msra.mxu0 %v474
        %718 = vmatprep.mubr.f32.mxu0 %v653
        %719 = vmatmul.mubr.f32.gmra.mrb[0].mxu0 %v652
        %v720 = vpop.f32.mrb[0].mxu0
        %v721 = vadd.f32 0.0, %v720
        %v722 = vpop.f32.mrb[0].mxu0
        %723 = vdwg.mxu0
        %725 = vmatprep.subr.mxu0 0.0
        %726 = vmatpush1.msra.mxu0 %v443
        %727 = vmatprep.subr.mxu0 0.0
        %728 = vmatpush1.msra.mxu0 %v444
        %729 = vmatprep.subr.mxu0 0.0
        %730 = vmatpush1.msra.mxu0 %v445
        %731 = vmatprep.subr.mxu0 0.0
        %732 = vmatpush1.msra.mxu0 %v446
        %733 = vmatprep.subr.mxu0 0.0
        %734 = vmatpush1.msra.mxu0 %v447
        %735 = vmatprep.subr.mxu0 0.0
        %736 = vmatpush1.msra.mxu0 %v448
        %737 = vmatprep.subr.mxu0 0.0
        %738 = vmatpush1.msra.mxu0 %v449
        %739 = vmatprep.subr.mxu0 0.0
        %740 = vmatpush1.msra.mxu0 %v450
        %741 = vmatprep.subr.mxu0 0.0
        %742 = vmatpush1.msra.mxu0 %v451
        %743 = vmatprep.subr.mxu0 0.0
        %744 = vmatpush1.msra.mxu0 %v452
        %745 = vmatprep.subr.mxu0 0.0
        %746 = vmatpush1.msra.mxu0 %v453
        %747 = vmatprep.subr.mxu0 0.0
        %748 = vmatpush1.msra.mxu0 %v454
        %749 = vmatprep.subr.mxu0 0.0
        %750 = vmatpush1.msra.mxu0 %v455
        %751 = vmatprep.subr.mxu0 0.0
        %752 = vmatpush1.msra.mxu0 %v456
        %753 = vmatprep.subr.mxu0 0.0
        %754 = vmatpush1.msra.mxu0 %v457
        %755 = vmatprep.subr.mxu0 0.0
        %756 = vmatpush1.msra.mxu0 %v458
        %757 = vmatprep.subr.mxu0 0.0
        %758 = vmatpush1.msra.mxu0 %v459
        %759 = vmatprep.subr.mxu0 0.0
        %760 = vmatpush1.msra.mxu0 %v460
        %761 = vmatprep.subr.mxu0 0.0
        %762 = vmatpush1.msra.mxu0 %v461
        %763 = vmatprep.subr.mxu0 0.0
        %764 = vmatpush1.msra.mxu0 %v462
        %765 = vmatprep.subr.mxu0 0.0
        %766 = vmatpush1.msra.mxu0 %v463
        %767 = vmatprep.subr.mxu0 0.0
        %768 = vmatpush1.msra.mxu0 %v464
        %769 = vmatprep.subr.mxu0 0.0
        %770 = vmatpush1.msra.mxu0 %v465
        %771 = vmatprep.subr.mxu0 0.0
        %772 = vmatpush1.msra.mxu0 %v466
        %773 = vmatprep.subr.mxu0 0.0
        %774 = vmatpush1.msra.mxu0 %v467
        %775 = vmatprep.subr.mxu0 0.0
        %776 = vmatpush1.msra.mxu0 %v468
        %777 = vmatprep.subr.mxu0 0.0
        %778 = vmatpush1.msra.mxu0 %v469
        %779 = vmatprep.subr.mxu0 0.0
        %780 = vmatpush1.msra.mxu0 %v470
        %781 = vmatprep.subr.mxu0 0.0
        %782 = vmatpush1.msra.mxu0 %v471
        %783 = vmatprep.subr.mxu0 0.0
        %784 = vmatpush1.msra.mxu0 %v472
        %785 = vmatprep.subr.mxu0 0.0
        %786 = vmatpush1.msra.mxu0 %v473
        %787 = vmatprep.subr.mxu0 0.0
        %788 = vmatpush1.msra.mxu0 %v474
        %789 = vmatprep.mubr.f32.mxu0 %v492
        %790 = vmatmul.mubr.f32.gmra.mrb[0].mxu0 %v438
        %v791 = vpop.f32.mrb[0].mxu0
        %v792 = vadd.f32 0.0, %v791
        %v793 = vpop.f32.mrb[0].mxu0
        %794 = vdwg.mxu0
        %v796 = vsel %vm493, %v721, 0
        %v799 = vsel %vm497, %v475, 0
        %801 = vmatprep.subr.mxu0 0.0
        %802 = vmatpush1.msra.mxu0 %v799
        %803 = vmatprep.subr.mxu0 0.0
        %804 = vmatpush1.msra.mxu0 0.0
        %805 = vmatprep.subr.mxu0 0.0
        %806 = vmatpush1.msra.mxu0 0.0
        %807 = vmatprep.subr.mxu0 0.0
        %808 = vmatpush1.msra.mxu0 0.0
        %809 = vmatprep.subr.mxu0 0.0
        %810 = vmatpush1.msra.mxu0 0.0
        %811 = vmatprep.subr.mxu0 0.0
        %812 = vmatpush1.msra.mxu0 0.0
        %813 = vmatprep.subr.mxu0 0.0
        %814 = vmatpush1.msra.mxu0 0.0
        %815 = vmatprep.subr.mxu0 0.0
        %816 = vmatpush1.msra.mxu0 0.0
        %817 = vmatprep.subr.mxu0 0.0
        %818 = vmatpush1.msra.mxu0 0.0
        %819 = vmatprep.subr.mxu0 0.0
        %820 = vmatpush1.msra.mxu0 0.0
        %821 = vmatprep.subr.mxu0 0.0
        %822 = vmatpush1.msra.mxu0 0.0
        %823 = vmatprep.subr.mxu0 0.0
        %824 = vmatpush1.msra.mxu0 0.0
        %825 = vmatprep.subr.mxu0 0.0
        %826 = vmatpush1.msra.mxu0 0.0
        %827 = vmatprep.subr.mxu0 0.0
        %828 = vmatpush1.msra.mxu0 0.0
        %829 = vmatprep.subr.mxu0 0.0
        %830 = vmatpush1.msra.mxu0 0.0
        %831 = vmatprep.subr.mxu0 0.0
        %832 = vmatpush1.msra.mxu0 0.0
        %833 = vmatprep.subr.mxu0 0.0
        %834 = vmatpush1.msra.mxu0 0.0
        %835 = vmatprep.subr.mxu0 0.0
        %836 = vmatpush1.msra.mxu0 0.0
        %837 = vmatprep.subr.mxu0 0.0
        %838 = vmatpush1.msra.mxu0 0.0
        %839 = vmatprep.subr.mxu0 0.0
        %840 = vmatpush1.msra.mxu0 0.0
        %841 = vmatprep.subr.mxu0 0.0
        %842 = vmatpush1.msra.mxu0 0.0
        %843 = vmatprep.subr.mxu0 0.0
        %844 = vmatpush1.msra.mxu0 0.0
        %845 = vmatprep.subr.mxu0 0.0
        %846 = vmatpush1.msra.mxu0 0.0
        %847 = vmatprep.subr.mxu0 0.0
        %848 = vmatpush1.msra.mxu0 0.0
        %849 = vmatprep.subr.mxu0 0.0
        %850 = vmatpush1.msra.mxu0 0.0
        %851 = vmatprep.subr.mxu0 0.0
        %852 = vmatpush1.msra.mxu0 0.0
        %853 = vmatprep.subr.mxu0 0.0
        %854 = vmatpush1.msra.mxu0 0.0
        %855 = vmatprep.subr.mxu0 0.0
        %856 = vmatpush1.msra.mxu0 0.0
        %857 = vmatprep.subr.mxu0 0.0
        %858 = vmatpush1.msra.mxu0 0.0
        %859 = vmatprep.subr.mxu0 0.0
        %860 = vmatpush1.msra.mxu0 0.0
        %861 = vmatprep.subr.mxu0 0.0
        %862 = vmatpush1.msra.mxu0 0.0
        %863 = vmatprep.subr.mxu0 0.0
        %864 = vmatpush1.msra.mxu0 0.0
        %865 = vmatprep.mubr.f32.mxu0 0.0
        %866 = vmatmul.mubr.f32.gmra.mrb[0].mxu0 %v796
        %v867 = vpop.f32.mrb[0].mxu0
        %v868 = vadd.f32 0.0, %v867
        %v869 = vpop.f32.mrb[0].mxu0
        %870 = vdwg.mxu0
        %v871 = vmul.f32 %v868, %v476
        %vm872 = vcmask 125952
        %v873 = vsel %vm872, %v871, 0.0
        %v874 = vrot.slane %v873, 4
        %v875 = vadd.f32 %v873, %v874
        %v876 = vrot.slane %v875, 2
        %v877 = vadd.f32 %v875, %v876
        %v878 = vrot.slane %v877, 1
        %v879 = vadd.f32 %v877, %v878
        %v881 = vsel %vm493, %v792, 0
        %883 = vmatprep.subr.mxu0 0.0
        %884 = vmatpush1.msra.mxu0 %v799
        %885 = vmatprep.subr.mxu0 0.0
        %886 = vmatpush1.msra.mxu0 0.0
        %887 = vmatprep.subr.mxu0 0.0
        %888 = vmatpush1.msra.mxu0 0.0
        %889 = vmatprep.subr.mxu0 0.0
        %890 = vmatpush1.msra.mxu0 0.0
        %891 = vmatprep.subr.mxu0 0.0
        %892 = vmatpush1.msra.mxu0 0.0
        %893 = vmatprep.subr.mxu0 0.0
        %894 = vmatpush1.msra.mxu0 0.0
        %895 = vmatprep.subr.mxu0 0.0
        %896 = vmatpush1.msra.mxu0 0.0
        %897 = vmatprep.subr.mxu0 0.0
        %898 = vmatpush1.msra.mxu0 0.0
        %899 = vmatprep.subr.mxu0 0.0
        %900 = vmatpush1.msra.mxu0 0.0
        %901 = vmatprep.subr.mxu0 0.0
        %902 = vmatpush1.msra.mxu0 0.0
        %903 = vmatprep.subr.mxu0 0.0
        %904 = vmatpush1.msra.mxu0 0.0
        %905 = vmatprep.subr.mxu0 0.0
        %906 = vmatpush1.msra.mxu0 0.0
        %907 = vmatprep.subr.mxu0 0.0
        %908 = vmatpush1.msra.mxu0 0.0
        %909 = vmatprep.subr.mxu0 0.0
        %910 = vmatpush1.msra.mxu0 0.0
        %911 = vmatprep.subr.mxu0 0.0
        %912 = vmatpush1.msra.mxu0 0.0
        %913 = vmatprep.subr.mxu0 0.0
        %914 = vmatpush1.msra.mxu0 0.0
        %915 = vmatprep.subr.mxu0 0.0
        %916 = vmatpush1.msra.mxu0 0.0
        %917 = vmatprep.subr.mxu0 0.0
        %918 = vmatpush1.msra.mxu0 0.0
        %919 = vmatprep.subr.mxu0 0.0
        %920 = vmatpush1.msra.mxu0 0.0
        %921 = vmatprep.subr.mxu0 0.0
        %922 = vmatpush1.msra.mxu0 0.0
        %923 = vmatprep.subr.mxu0 0.0
        %924 = vmatpush1.msra.mxu0 0.0
        %925 = vmatprep.subr.mxu0 0.0
        %926 = vmatpush1.msra.mxu0 0.0
        %927 = vmatprep.subr.mxu0 0.0
        %928 = vmatpush1.msra.mxu0 0.0
        %929 = vmatprep.subr.mxu0 0.0
        %930 = vmatpush1.msra.mxu0 0.0
        %931 = vmatprep.subr.mxu0 0.0
        %932 = vmatpush1.msra.mxu0 0.0
        %933 = vmatprep.subr.mxu0 0.0
        %934 = vmatpush1.msra.mxu0 0.0
        %935 = vmatprep.subr.mxu0 0.0
        %936 = vmatpush1.msra.mxu0 0.0
        %937 = vmatprep.subr.mxu0 0.0
        %938 = vmatpush1.msra.mxu0 0.0
        %939 = vmatprep.subr.mxu0 0.0
        %940 = vmatpush1.msra.mxu0 0.0
        %941 = vmatprep.subr.mxu0 0.0
        %942 = vmatpush1.msra.mxu0 0.0
        %943 = vmatprep.subr.mxu0 0.0
        %944 = vmatpush1.msra.mxu0 0.0
        %945 = vmatprep.subr.mxu0 0.0
        %946 = vmatpush1.msra.mxu0 0.0
        %947 = vmatprep.mubr.f32.mxu0 0.0
        %948 = vmatmul.mubr.f32.gmra.mrb[0].mxu0 %v881
        %v949 = vpop.f32.mrb[0].mxu0
        %v950 = vadd.f32 0.0, %v949
        %v951 = vpop.f32.mrb[0].mxu0
        %952 = vdwg.mxu0
        %v953 = vmul.f32 %v950, %v476
        %v954 = vsel %vm872, %v953, 0.0
        %v955 = vrot.slane %v954, 4
        %v956 = vadd.f32 %v954, %v955
        %v957 = vrot.slane %v956, 2
        %v958 = vadd.f32 %v956, %v957
        %v959 = vrot.slane %v958, 1
        %v960 = vadd.f32 %v958, %v959
        %v962 = vsel %vm493, %v477, 0
        %v965 = vsel %vm493, %v478, 0
        %v967 = vsel %vm497, %v721, 0
        %969 = vmatprep.subr.mxu0 0.0
        %970 = vmatpush1.msra.mxu0 %v967
        %971 = vmatprep.subr.mxu0 0.0
        %972 = vmatpush1.msra.mxu0 0.0
        %973 = vmatprep.subr.mxu0 0.0
        %974 = vmatpush1.msra.mxu0 0.0
        %975 = vmatprep.subr.mxu0 0.0
        %976 = vmatpush1.msra.mxu0 0.0
        %977 = vmatprep.subr.mxu0 0.0
        %978 = vmatpush1.msra.mxu0 0.0
        %979 = vmatprep.subr.mxu0 0.0
        %980 = vmatpush1.msra.mxu0 0.0
        %981 = vmatprep.subr.mxu0 0.0
        %982 = vmatpush1.msra.mxu0 0.0
        %983 = vmatprep.subr.mxu0 0.0
        %984 = vmatpush1.msra.mxu0 0.0
        %985 = vmatprep.subr.mxu0 0.0
        %986 = vmatpush1.msra.mxu0 0.0
        %987 = vmatprep.subr.mxu0 0.0
        %988 = vmatpush1.msra.mxu0 0.0
        %989 = vmatprep.subr.mxu0 0.0
        %990 = vmatpush1.msra.mxu0 0.0
        %991 = vmatprep.subr.mxu0 0.0
        %992 = vmatpush1.msra.mxu0 0.0
        %993 = vmatprep.subr.mxu0 0.0
        %994 = vmatpush1.msra.mxu0 0.0
        %995 = vmatprep.subr.mxu0 0.0
        %996 = vmatpush1.msra.mxu0 0.0
        %997 = vmatprep.subr.mxu0 0.0
        %998 = vmatpush1.msra.mxu0 0.0
        %999 = vmatprep.subr.mxu0 0.0
        %1000 = vmatpush1.msra.mxu0 0.0
        %1001 = vmatprep.subr.mxu0 0.0
        %1002 = vmatpush1.msra.mxu0 0.0
        %1003 = vmatprep.subr.mxu0 0.0
        %1004 = vmatpush1.msra.mxu0 0.0
        %1005 = vmatprep.subr.mxu0 0.0
        %1006 = vmatpush1.msra.mxu0 0.0
        %1007 = vmatprep.subr.mxu0 0.0
        %1008 = vmatpush1.msra.mxu0 0.0
        %1009 = vmatprep.subr.mxu0 0.0
        %1010 = vmatpush1.msra.mxu0 0.0
        %1011 = vmatprep.subr.mxu0 0.0
        %1012 = vmatpush1.msra.mxu0 0.0
        %1013 = vmatprep.subr.mxu0 0.0
        %1014 = vmatpush1.msra.mxu0 0.0
        %1015 = vmatprep.subr.mxu0 0.0
        %1016 = vmatpush1.msra.mxu0 0.0
        %1017 = vmatprep.subr.mxu0 0.0
        %1018 = vmatpush1.msra.mxu0 0.0
        %1019 = vmatprep.subr.mxu0 0.0
        %1020 = vmatpush1.msra.mxu0 0.0
        %1021 = vmatprep.subr.mxu0 0.0
        %1022 = vmatpush1.msra.mxu0 0.0
        %1023 = vmatprep.subr.mxu0 0.0
        %1024 = vmatpush1.msra.mxu0 0.0
        %1025 = vmatprep.subr.mxu0 0.0
        %1026 = vmatpush1.msra.mxu0 0.0
        %1027 = vmatprep.subr.mxu0 0.0
        %1028 = vmatpush1.msra.mxu0 0.0
        %1029 = vmatprep.subr.mxu0 0.0
        %1030 = vmatpush1.msra.mxu0 0.0
        %1031 = vmatprep.subr.mxu0 0.0
        %1032 = vmatpush1.msra.mxu0 0.0
        %1033 = vmatprep.mubr.f32.mxu0 0.0
        %1034 = vmatmul.mubr.f32.gmra.mrb[0].mxu0 %v962
        %v1035 = vpop.f32.mrb[0].mxu0
        %v1036 = vadd.f32 0.0, %v1035
        %v1037 = vpop.f32.mrb[0].mxu0
        %1038 = vmatprep.mubr.f32.mxu0 0.0
        %1039 = vmatmul.mubr.f32.gmra.mrb[0].mxu0 %v965
        %v1040 = vpop.f32.mrb[0].mxu0
        %v1041 = vadd.f32 0.0, %v1040
        %v1042 = vpop.f32.mrb[0].mxu0
        %1043 = vdwg.mxu0
        %v1044 = vmul.f32 %v1036, %v479
        %v1045 = vmul.f32 %v1041, %v480
        %v1046 = vsel %vm493, %v1044, 0.0
        %1047 = vadd.xlane.f32.xlu0 %v1046
        %v1048 = vpop.xlane.xlu0 %1047
        %v1049 = vsel %vm493, %v1045, 0.0
        %1050 = vadd.xlane.f32.xlu0 %v1049
        %v1051 = vpop.xlane.xlu0 %1050
        %vm1052 = vcmp.gt.f32.partialorder %v879, %v1048
        %vm1053 = vcmp.gt.f32.partialorder %v879, %v1051
        %vm1054 = vcmp.eq.f32.partialorder %v879, %v1048
        %vm1055 = vcmp.eq.f32.partialorder %v879, %v1051
        %v1056 = vlaneseq
        %v1057 = vshrl.u32 %v1056, 7
        %v1058 = vsub.s32 0, %v1057
        %v1059 = vrot.slane %v481, %v1058
        %1060 = vset.pattern.permute.xlu0 0
        %1061 = vperm.xlu0 %1060, %v482
        %v1062 = vpop.permute.xlu0 %1061
        %1063 = vset.pattern.permute.xlu0 0
        %1064 = vperm.xlu0 %1063, %v483
        %v1065 = vpop.permute.xlu0 %1064
        %vm1066 = vcmp.lt.s32.totalorder %v1059, %v1062
        %vm1067 = vcmp.lt.s32.totalorder %v1059, %v1065
        %vm1068 = vmand %vm1054, %vm1066
        %vm1069 = vmand %vm1055, %vm1067
        %vm1070 = vmor %vm1052, %vm1068
        %vm1071 = vmor %vm1053, %vm1069
        %v1072 = vsel %vm1070, 1, 0
        %v1073 = vsel %vm1071, 1, 0
        %vm1074 = vcmask 130048
        %v1075 = vsel %vm1074, %v1072, 0
        %v1076 = vand.u32 %v1075, 65535
        %v1077 = vshrl.u32 %v1075, 16
        %v1078 = vcvt.s32.f32 %v1076
        %v1079 = vcvt.s32.f32 %v1077
        %1080 = vadd.xlane.f32.xlu0 %v1078
        %v1081 = vpop.xlane.xlu0 %1080
        %1082 = vadd.xlane.f32.xlu0 %v1079
        %v1083 = vpop.xlane.xlu0 %1082
        %v1084 = vcvt.f32.s32 %v1081
        %v1085 = vcvt.f32.s32 %v1083
        %v1086 = vshll.u32 %v1085, 16
        %v1087 = vadd.s32 %v1086, %v1084
        %v1088 = vsel %vm1074, %v1073, 0
        %v1089 = vand.u32 %v1088, 65535
        %v1090 = vshrl.u32 %v1088, 16
        %v1091 = vcvt.s32.f32 %v1089
        %v1092 = vcvt.s32.f32 %v1090
        %1093 = vadd.xlane.f32.xlu0 %v1091
        %v1094 = vpop.xlane.xlu0 %1093
        %1095 = vadd.xlane.f32.xlu0 %v1092
        %v1096 = vpop.xlane.xlu0 %1095
        %v1097 = vcvt.f32.s32 %v1094
        %v1098 = vcvt.f32.s32 %v1096
        %v1099 = vshll.u32 %v1098, 16
        %v1100 = vadd.s32 %v1099, %v1097
        %vm1101 = vcmp.eq.s32.totalorder %v1087, %v1059
        %vm1102 = vcmp.eq.s32.totalorder %v1100, %v1059
        %v1103 = vsel %vm1101, 1, 0
        %v1104 = vsel %vm1102, 1, 0
        %v1105 = vcvt.s32.f32 %v1103
        %v1106 = vcvt.s32.f32 %v1104
        %1108 = vset.pattern.permute.xlu0 0
        %1109 = vperm.xlu0 %1108, %v484
        %v1110 = vpop.permute.xlu0 %1109
        %1113 = vset.pattern.permute.xlu0 0
        %1114 = vperm.xlu0 %1113, %v485
        %v1115 = vpop.permute.xlu0 %1114
        %v1117 = vmul.f32 %v1105, %v1110
        %v1118 = vmul.f32 %v1106, %v1115
        %v1119 = vsel %vm1074, %v1117, 0.0
        %v1120 = vsel %vm1074, %v1118, 0.0
        %v1121 = vadd.f32 %v1119, %v1120
        %v1122 = vrot.slane %v1121, 4
        %v1123 = vadd.f32 %v1121, %v1122
        %v1124 = vrot.slane %v1123, 2
        %v1125 = vadd.f32 %v1123, %v1124
        %v1126 = vrot.slane %v1125, 1
        %v1127 = vadd.f32 %v1125, %v1126
        %v1128 = vadd.f32 %v1127, 0.0
        %v1129 = vsub.f32 1.0, %v1128
        %v1130 = vmul.f32 %v960, %v1129
        %vm1131 = vcmask 122880
        %1132 = vst.msk [vmem:[%s432] sm:$0x1] %vm1131, %v1130
        %s1133 = sand.u32 %s313, 1
        %s1134 = scalar_lea.sflag [#allocation3], %s1133
        %s1135 = sand.u32 %s313, 1
        %s1136 = scalar_lea.vmem [#allocation2], %s1135
        // Predicated region
        $region73: #{tpu_custom_call.1} parent=71 // pred_check
          %p1137 = pneg %p323
        $region74: #{tpu_custom_call.1} parent=71 // pred_check_branch
          %1139 = sbr.rel (%p1137) target = $region76
        $region75: #{tpu_custom_call.1} parent=71 // pred_region
          %s1141 = ssub.s32 16, 16
          %1142 = vsyncadd %s1134, %s1141
          %s1143 = smul.addr %s27, 16
          %s1144 = scalar_lea.hbm %s13, %s1143
          %s1146 = sshll.u32 %s1136, 4
          %s1147 = int_to_ptr.vmem [resolvable:$true] %s1146
          %1149 = dma.vmem_to_hbm [thread:$0]  %s1147, 16, %s1144, %s1134
        $region76: #{tpu_custom_call.1} parent=71 // pred_fallthru
          _
      $region72: #{tpu_custom_call.1} parent=5 // pred_fallthru
        _
      %p1150 = scmp.le.s32.totalorder 2, %s22
      // Predicated region
      $region77: #{tpu_custom_call.1} parent=5 // pred_check
        %p1151 = pneg %p1150
      $region78: #{tpu_custom_call.1} parent=5 // pred_check_branch
        %1153 = sbr.rel (%p1151) target = $region80
      $region79: #{tpu_custom_call.1} parent=5 // pred_region
        %s1154 = ssub.s32 %s22, 2
        // Predicated region
        $region81: #{tpu_custom_call.1} parent=79 // pred_check
          %p1155 = pneg %p329
        $region82: #{tpu_custom_call.1} parent=79 // pred_check_branch
          %1157 = sbr.rel (%p1155) target = $region84
        $region83: #{tpu_custom_call.1} parent=79 // pred_region
          %s1158 = sand.u32 %s314, 1
          %s1159 = scalar_lea.sflag [#allocation3], %s1158
          %s1160 = sand.u32 %s314, 1
          %s1161 = scalar_lea.vmem [#allocation2], %s1160
          %1162 = dma.done %s1159, 16
        $region84: #{tpu_custom_call.1} parent=79 // pred_fallthru
          _
      $region80: #{tpu_custom_call.1} parent=5 // pred_fallthru
        _
    $region6: #{tpu_custom_call.1} parent=1 // loop_footer
      %s26 = sadd.s32 1, %s22
    $region7: #{tpu_custom_call.1} parent=1 // loop_footer_branch
      %21 = sbr.rel target = $region3
    $region8: #{tpu_custom_call.1} parent=1 // loop_exit
      _
    %1163 = vsyncpa [#allocation3], 1
    %s1164 = scalar_lea.sflag [#allocation3], 1
    %1165 = vsyncpa %s1164, 1

</llo_original>
